<compile_context>
chip_gen: v7x
topology: tpu7x:2x2x1
jax: 0.10.0
libtpu: 0.0.40
codegen_flags: <defaults>
</compile_context>

<pallas_src>
import functools
from typing import NamedTuple

import jax
import jax.numpy as jnp
from jax.experimental import pallas as pl
from jax.experimental.pallas import tpu as pltpu


def _round_up(x: int, m: int) -> int:
    return ((x + m - 1) // m) * m


def _largest_div_tile(total128: int, target: int) -> int:
    """Largest multiple of 128 <= target that divides total128 (>=128)."""
    target = max(128, min(target, total128))
    best = 128
    d = 128
    while d <= target:
        if total128 % d == 0:
            best = d
        d += 128
    return best


def _tpu_generation_info():
    """(vmem_capacity_bytes, num_tensorcores_per_device) with safe fallbacks."""
    kind = ""
    try:
        kind = (jax.devices()[0].device_kind or "").lower()
    except Exception:
        pass
    vmem = None
    try:
        vmem = pltpu.get_tpu_info().vmem_capacity_bytes
    except Exception:
        pass
    if vmem is None:
        # v7x: 64 MiB / TensorCore.  v5e / v6e: 128 MiB.  Unknown -> conservative.
        vmem = (64 << 20) if ("v7" in kind or not kind) else (128 << 20)
    num_tc = 2 if any(t in kind for t in ("v4", "v5p", "v7")) else 1
    return vmem, num_tc


# --------------------------------------------------------------------------- #
# Kernels
# --------------------------------------------------------------------------- #
def _pooler_kernel_single_k(x_ref, w_ref, b_ref, o_ref, *, compute_dtype):
    """Whole-K-in-one-block fast path (no accumulator scratch, no pl.when)."""
    x = x_ref[...].astype(compute_dtype)           # in-kernel cast (VPU, hidden under DMA)
    acc = jnp.dot(x, w_ref[...], preferred_element_type=jnp.float32)
    o_ref[...] = jnp.tanh(acc + b_ref[...]).astype(o_ref.dtype)


def _pooler_kernel_multi_k(x_ref, w_ref, b_ref, o_ref, acc_ref, *, compute_dtype):
    """K reduced over the innermost ('arbitrary') grid axis with an f32 scratch."""
    k = pl.program_id(2)

    @pl.when(k == 0)
    def _():
        acc_ref[...] = jnp.zeros_like(acc_ref)

    x = x_ref[...].astype(compute_dtype)
    acc_ref[...] += jnp.dot(x, w_ref[...], preferred_element_type=jnp.float32)

    @pl.when(k == pl.num_programs(2) - 1)
    def _():
        # Bias add + tanh in f32 (EUP), then cast to the output dtype.
        o_ref[...] = jnp.tanh(acc_ref[...] + b_ref[...]).astype(o_ref.dtype)


# --------------------------------------------------------------------------- #
# One-time parameter preparation (hoisted out of the forward path)
# --------------------------------------------------------------------------- #
class PoolerLLaMAParams(NamedTuple):
    weight_t: jax.Array        # [Kp, N]  compute_dtype, zero-padded along K
    bias_row: jax.Array        # [1, N]   float32
    in_features: int
    out_features: int
    padded_k: int
    tn: int
    tk: int
    compute_dtype: jnp.dtype
    vmem_limit_bytes: int
    num_tc: int


def prepare_pooler_llama_params(weight, bias, *, compute_dtype=jnp.bfloat16,
                                tn=None, tk=None) -> PoolerLLaMAParams:
    """Transpose + cast + (K-)pad W once; pick generation-aware tiles."""
    N, K = weight.shape
    assert bias.shape == (N,)
    cdt = jnp.dtype(compute_dtype)
    itemsize = cdt.itemsize

    vmem_cap, num_tc = _tpu_generation_info()
    big_vmem = vmem_cap >= (96 << 20)                       # v5e / v6e (128 MiB)
    vmem_limit = (96 << 20) if big_vmem else (48 << 20)     # v7x: stay under 64 MiB
    resident_thresh = (24 << 20) if big_vmem else (10 << 20)
    stream_block_budget = 6 << 20                           # per-step streamed W^T block

    K128 = _round_up(K, 128)
    N128 = _round_up(N, 128)
    w_bytes = K128 * N128 * itemsize

    if tn is None and tk is None:
        if w_bytes <= resident_thresh:
            # Whole W^T as a single block: its block index never changes, so
            # Pallas keeps it resident in VMEM for the whole grid.
            tn, tk = N, K
        else:
            rows = stream_block_budget // (N128 * itemsize)
            if rows >= 128:
                # Full output width (lane-dense, contiguous DMA rows, no j axis
                # for W -> x is never re-streamed per output-column tile).
                tn = N
                tk = _largest_div_tile(K128, (rows // 128) * 128)
            else:
                # out_features too large for a full-width block; tile N too.
                tn = max(128, min(N128,
                                  ((stream_block_budget // (512 * itemsize)) // 128) * 128))
                tk = _largest_div_tile(K128, 512)
    else:
        if tn is None:
            tn = N
        if tk is None:
            tk = K

    tn, tk = int(tn), int(tk)
    if tk >= K:
        tk, Kp = K, K                                 # single K block, no padding
    else:
        assert tk % 128 == 0, "tk must be a multiple of 128 (or >= in_features)"
        Kp = _round_up(K, tk)
    if tn >= N:
        tn = N
    else:
        assert tn % 128 == 0, "tn must be a multiple of 128 (or >= out_features)"

    wT = jnp.transpose(weight).astype(cdt)            # [K, N], cast once
    if Kp != K:
        wT = jnp.pad(wT, ((0, Kp - K), (0, 0)))       # zero-pad K once
    b_row = bias.astype(jnp.float32).reshape(1, N)

    return PoolerLLaMAParams(wT, b_row, K, N, Kp, tn, tk, cdt, vmem_limit, num_tc)


# --------------------------------------------------------------------------- #
# Forward
# --------------------------------------------------------------------------- #
def pooler_llama_forward(hidden_states, params: PoolerLLaMAParams, *, tm=None):
    """tanh(hidden_states @ W^T + bias) via a Pallas TPU kernel."""
    K, N, Kp = params.in_features, params.out_features, params.padded_k
    assert hidden_states.shape[-1] == K
    lead_shape = hidden_states.shape[:-1]
    out_dtype = hidden_states.dtype

    x2d = hidden_states.reshape(-1, K)
    M = x2d.shape[0]

    # Only K is zero-padded (garbage along K would corrupt valid outputs);
    # M / N remainders are handled by Pallas' masked boundary blocks.
    if Kp != K:
        x2d = jnp.pad(x2d, ((0, 0), (0, Kp - K)))

    if tm is None:
        tm = min(256, _round_up(M, 16))
    tm = max(8, int(tm))

    tn, tk = params.tn, params.tk
    m_blocks = pl.cdiv(M, tm)
    n_blocks = pl.cdiv(N, tn)
    k_blocks = Kp // tk

    # 2-TensorCore chips (v7x / megacore): avoid a collapsed (1,1) parallel grid.
    if params.num_tc >= 2 and m_blocks * n_blocks == 1:
        if N >= 256 and tn >= 256:
            tn = _round_up(-(-tn // 2), 128)
            n_blocks = pl.cdiv(N, tn)
        elif M >= 16:
            tm = max(8, _round_up(-(-M // 2), 8))
            m_blocks = pl.cdiv(M, tm)

    cdt = params.compute_dtype
    if k_blocks == 1:
        kernel = functools.partial(_pooler_kernel_single_k, compute_dtype=cdt)
        grid = (m_blocks, n_blocks)
        in_specs = [
            pl.BlockSpec((tm, Kp), lambda i, j: (i, 0)),      # x tile
            pl.BlockSpec((Kp, tn), lambda i, j: (0, j)),      # W^T tile (resident if n_blocks==1)
            pl.BlockSpec((1, tn), lambda i, j: (0, j)),       # bias row
        ]
        out_specs = pl.BlockSpec((tm, tn), lambda i, j: (i, j))
        scratch_shapes = []
        dims = ("parallel", "parallel")
    else:
        kernel = functools.partial(_pooler_kernel_multi_k, compute_dtype=cdt)
        grid = (m_blocks, n_blocks, k_blocks)
        in_specs = [
            pl.BlockSpec((tm, tk), lambda i, j, k: (i, k)),   # x tile
            pl.BlockSpec((tk, tn), lambda i, j, k: (k, j)),   # W^T tile
            pl.BlockSpec((1, tn), lambda i, j, k: (0, j)),    # bias row (K-invariant)
        ]
        out_specs = pl.BlockSpec((tm, tn), lambda i, j, k: (i, j))
        scratch_shapes = [pltpu.VMEM((tm, tn), jnp.float32)]
        dims = ("parallel", "parallel", "arbitrary")

    out = pl.pallas_call(
        kernel,
        out_shape=jax.ShapeDtypeStruct((M, N), out_dtype),
        grid_spec=pltpu.PrefetchScalarGridSpec(
            num_scalar_prefetch=0,
            grid=grid,
            in_specs=in_specs,
            out_specs=out_specs,
            scratch_shapes=scratch_shapes,
        ),
        compiler_params=pltpu.CompilerParams(
            dimension_semantics=dims,
            vmem_limit_bytes=params.vmem_limit_bytes,
        ),
    )(x2d, params.weight_t, params.bias_row)

    return out.reshape(*lead_shape, N)


# --------------------------------------------------------------------------- #
# Self-test
# --------------------------------------------------------------------------- #
if __name__ == "__main__":
    key = jax.random.PRNGKey(0)
    k_x, k_w, k_b, k_x2, k_w2, k_b2 = jax.random.split(key, 6)

    def reference(x, w, b):
        # High-precision reference: tanh(x @ W^T + b)
        y = jnp.einsum("...k,nk->...n", x, w, precision=jax.lax.Precision.HIGHEST)
        return jnp.tanh(y + b)

    # ---- Test 1: small pooler shapes consistent with the module's forward ----
    #   hidden_states: [batch=2, seq=8, in_features=64] -> pooled: [2, 8, 256]
    batch, seq, in_features, out_features = 2, 8, 64, 256
    hidden_states = jax.random.normal(k_x, (batch, seq, in_features), jnp.float32)
    weight = jax.random.normal(k_w, (out_features, in_features), jnp.float32) * 0.02
    bias = jax.random.normal(k_b, (out_features,), jnp.float32) * 0.02
    ref = reference(hidden_states, weight, bias)

    # Default bf16 operand path (W cast/pad hoisted into prepare; x cast in-kernel).
    params_bf16 = prepare_pooler_llama_params(weight, bias)
    pooled = jax.block_until_ready(pooler_llama_forward(hidden_states, params_bf16))
    assert pooled.shape == (batch, seq, out_features)
    assert jnp.allclose(pooled, ref, atol=2e-2, rtol=2e-2), "bf16 path mismatch"

    # Full-precision path for callers that need parity with the PyTorch module.
    params_f32 = prepare_pooler_llama_params(weight, bias, compute_dtype=jnp.float32)
    pooled_f32 = jax.block_until_ready(pooler_llama_forward(hidden_states, params_f32))
    assert jnp.allclose(pooled_f32, ref, atol=1e-3, rtol=1e-3), "f32 path mismatch"

    # ---- Test 2: exercise the multi-K accumulator path + masked M/N remainders ----
    # (M=15 rows, K=320 not a multiple of 128, N=384, forced small tiles -> grid (1,3,3))
    b2, s2, in2, out2 = 3, 5, 320, 384
    x2 = jax.random.normal(k_x2, (b2, s2, in2), jnp.float32)
    w2 = jax.random.normal(k_w2, (out2, in2), jnp.float32) * 0.02
    bias2 = jax.random.normal(k_b2, (out2,), jnp.float32) * 0.02
    params2 = prepare_pooler_llama_params(w2, bias2, compute_dtype=jnp.float32,
                                          tn=128, tk=128)
    pooled2 = jax.block_until_ready(pooler_llama_forward(x2, params2))
    ref2 = reference(x2, w2, bias2)
    assert pooled2.shape == (b2, s2, out2)
    assert jnp.allclose(pooled2, ref2, atol=1e-3, rtol=1e-3), "tiled path mismatch"

    print("KERNEL_OK")
</pallas_src>

<mosaic_0001>
module attributes {stable_mosaic.version = 11 : i64} {
  func.func @_pooler_kernel_single_k(%arg0: i32, %arg1: i32, %arg2: memref<16x64xf32, #tpu.memory_space<vmem>>, %arg3: memref<64x256xbf16, #tpu.memory_space<vmem>>, %arg4: memref<1x256xf32, #tpu.memory_space<vmem>>, %arg5: memref<16x256xf32, #tpu.memory_space<vmem>>) attributes {dimension_semantics = [#tpu.dimension_semantics<parallel>, #tpu.dimension_semantics<parallel>], iteration_bounds = array<i64: 1, 1>, scalar_prefetch = 0 : i64, scratch_operands = 0 : i64, tpu.core_type = #tpu.core_type<tc>, window_params = [{transform_indices = @transform_0, window_bounds = array<i64: 16, 64>}, {transform_indices = @transform_1, window_bounds = array<i64: 64, 256>}, {transform_indices = @transform_2, window_bounds = array<i64: 1, 256>}, {transform_indices = @transform_3, window_bounds = array<i64: 16, 256>}]} {
    %c0 = arith.constant 0 : index
    %c0_0 = arith.constant 0 : index
    %0 = vector.load %arg2[%c0, %c0_0] : memref<16x64xf32, #tpu.memory_space<vmem>>, vector<16x64xf32>
    %1 = arith.truncf %0 : vector<16x64xf32> to vector<16x64xbf16>
    %c0_1 = arith.constant 0 : index
    %c0_2 = arith.constant 0 : index
    %2 = vector.load %arg3[%c0_1, %c0_2] : memref<64x256xbf16, #tpu.memory_space<vmem>>, vector<64x256xbf16>
    %cst = arith.constant dense<0.000000e+00> : vector<16x256xf32>
    %3 = tpu.matmul %1, %2, %cst {dimension_numbers = #tpu.dot_dimension_numbers<[1], [0], [0], [1], [0, 0, 1, 1], [], []>} : vector<16x64xbf16>, vector<64x256xbf16>, vector<16x256xf32> -> vector<16x256xf32>
    %c0_3 = arith.constant 0 : index
    %c0_4 = arith.constant 0 : index
    %4 = vector.load %arg4[%c0_3, %c0_4] : memref<1x256xf32, #tpu.memory_space<vmem>>, vector<1x256xf32>
    %5 = vector.broadcast %4 : vector<1x256xf32> to vector<16x256xf32>
    %6 = arith.addf %3, %5 : vector<16x256xf32>
    %7 = math.tanh %6 : vector<16x256xf32>
    %c0_5 = arith.constant 0 : index
    %c0_6 = arith.constant 0 : index
    %8 = vector.load %arg5[%c0_5, %c0_6] : memref<16x256xf32, #tpu.memory_space<vmem>>, vector<16x256xf32>
    tpu.vector_store %arg5[%c0_5, %c0_6], %7 {strides = array<i32>} : memref<16x256xf32, #tpu.memory_space<vmem>>, vector<16x256xf32>,
    return
  }
  func.func @transform_0(%arg0: i32, %arg1: i32) -> (i32, i32) {
    %c0_i32 = arith.constant 0 : i32
    %c0_i32_0 = arith.constant 0 : i32
    return %arg0, %c0_i32 : i32, i32
  }
  func.func @transform_1(%arg0: i32, %arg1: i32) -> (i32, i32) {
    %c0_i32 = arith.constant 0 : i32
    %c0_i32_0 = arith.constant 0 : i32
    return %c0_i32, %arg1 : i32, i32
  }
  func.func @transform_2(%arg0: i32, %arg1: i32) -> (i32, i32) {
    %c0_i32 = arith.constant 0 : i32
    %c0_i32_0 = arith.constant 0 : i32
    return %c0_i32, %arg1 : i32, i32
  }
  func.func @transform_3(%arg0: i32, %arg1: i32) -> (i32, i32) {
    %c0_i32 = arith.constant 0 : i32
    return %arg0, %arg1 : i32, i32
  }
}

</mosaic_0001>

<llo_original>
// kernel: tpu_custom_call.1
$region0: #{tpu_custom_call.1}
  #allocation0 [shape = 'u32[]', space=smem, size = 0x4, offset = 0x4, fixed_abs, tag = 'smem constant byte address 0x4 - core index']
  #allocation1 [shape = 'u32[144,128]{1,0:T(1,128)}', space=vmem, size = 0x12000, scoped, tag = 'internal scratch']
  %s0 = inlined_call_operand.hbm [shape: f32[16,64], index: 0, kind: input, shape index: {}]
  %s1 = inlined_call_operand.hbm [shape: bf16[64,256], index: 1, kind: input, shape index: {}]
  %s2 = inlined_call_operand.hbm [shape: f32[1,256], index: 2, kind: input, shape index: {}]
  %s3 = inlined_call_operand.hbm [shape: f32[16,256], index: 3, kind: output, shape index: {}]
  %s4 = sld [smem:[#allocation0]]
  $region34: #{tpu_custom_call.1} parent=0
    _
  %s6 = ssub.s32 1, %s4
  %s7 = scalar_select 0, %s6, %s4
  $region1: #{tpu_custom_call.1} parent=0
    #allocation2 [shape = 'u8[8192]{0}', space=vmem, size = 0x2000, scoped, tag = 'input window, operand 0, single buffered']
    #allocation3 [shape = 's32[1]{0}', space=sflag, size = 0x4, scoped, tag = 'scoped memory for tpu_custom_call.1']
    #allocation4 [shape = 's32[1]{0}', space=sflag, size = 0x4, scoped, tag = 'scoped memory for tpu_custom_call.1']
    #allocation5 [shape = 'u8[32768]{0}', space=vmem, size = 0x8000, scoped, tag = 'input window, operand 1, single buffered']
    #allocation6 [shape = 's32[1]{0}', space=sflag, size = 0x4, scoped, tag = 'scoped memory for tpu_custom_call.1']
    #allocation7 [shape = 'u8[1024]{0}', space=vmem, size = 0x400, scoped, tag = 'input window, operand 2, single buffered']
    #allocation8 [shape = 'u8[16384]{0}', space=vmem, size = 0x4000, scoped, tag = 'output window, operand 0, single buffered']
    %8 = vsyncpa [#allocation3], 0
    %9 = vsyncpa [#allocation6], 0
    %10 = vsyncpa [#allocation4], 0
    // Predicated region
    $region2: #{tpu_custom_call.1} parent=1 // pred_check
      _
    $region3: #{tpu_custom_call.1} parent=1 // pred_check_branch
      %12 = sbr.rel (0) target = $region5
    $region4: #{tpu_custom_call.1} parent=1 // pred_region
      %s14 = ssub.s32 256, 256
      %15 = vsyncadd [#allocation3], %s14
      %s16 = sshll.u32 [#allocation2], 4
      %s17 = int_to_ptr.vmem [resolvable:$true] %s16
      %22 = dma.hbm_to_vmem [thread:$0]  %s0, 256, %s17, [#allocation3], 128, 128, 8
    $region5: #{tpu_custom_call.1} parent=1 // pred_fallthru
      _
    // Predicated region
    $region6: #{tpu_custom_call.1} parent=1 // pred_check
      _
    $region7: #{tpu_custom_call.1} parent=1 // pred_check_branch
      %24 = sbr.rel (0) target = $region9
    $region8: #{tpu_custom_call.1} parent=1 // pred_region
      %s26 = ssub.s32 1024, 1024
      %27 = vsyncadd [#allocation6], %s26
      %s28 = sshll.u32 [#allocation5], 4
      %s29 = int_to_ptr.vmem [resolvable:$true] %s28
      %34 = dma.hbm_to_vmem [thread:$0]  %s1, 1024, %s29, [#allocation6], 128, 128, 8
    $region9: #{tpu_custom_call.1} parent=1 // pred_fallthru
      _
    // Predicated region
    $region10: #{tpu_custom_call.1} parent=1 // pred_check
      _
    $region11: #{tpu_custom_call.1} parent=1 // pred_check_branch
      %36 = sbr.rel (0) target = $region13
    $region12: #{tpu_custom_call.1} parent=1 // pred_region
      %s38 = ssub.s32 32, 32
      %39 = vsyncadd [#allocation6], %s38
      %s41 = sshll.u32 [#allocation7], 4
      %s42 = int_to_ptr.vmem [resolvable:$true] %s41
      %44 = dma.hbm_to_vmem [thread:$0]  %s2, 32, %s42, [#allocation6]
    $region13: #{tpu_custom_call.1} parent=1 // pred_fallthru
      _
    // Predicated region
    $region14: #{tpu_custom_call.1} parent=1 // pred_check
      _
    $region15: #{tpu_custom_call.1} parent=1 // pred_check_branch
      %46 = sbr.rel (0) target = $region17
    $region16: #{tpu_custom_call.1} parent=1 // pred_region
      %47 = dma.done [#allocation3], 256
    $region17: #{tpu_custom_call.1} parent=1 // pred_fallthru
      _
    // Predicated region
    $region18: #{tpu_custom_call.1} parent=1 // pred_check
      _
    $region19: #{tpu_custom_call.1} parent=1 // pred_check_branch
      %49 = sbr.rel (0) target = $region21
    $region20: #{tpu_custom_call.1} parent=1 // pred_region
      %50 = dma.done [#allocation6], 1024
    $region21: #{tpu_custom_call.1} parent=1 // pred_fallthru
      _
    // Predicated region
    $region22: #{tpu_custom_call.1} parent=1 // pred_check
      _
    $region23: #{tpu_custom_call.1} parent=1 // pred_check_branch
      %52 = sbr.rel (0) target = $region25
    $region24: #{tpu_custom_call.1} parent=1 // pred_region
      %53 = dma.done [#allocation6], 32
    $region25: #{tpu_custom_call.1} parent=1 // pred_fallthru
      _
    %v55 = vld [vmem:[#allocation2] sm:$0xff]
    %v56 = vld [vmem:[#allocation2 + $0x8] sm:$0xff]
    %v57 = vpack.c.bf16 %v56, %v55
    %v58 = vld [vmem:[#allocation5] sm:$0xff]
    %v59 = vld [vmem:[#allocation5 + $0x8] sm:$0xff]
    %v60 = vld [vmem:[#allocation5 + $0x10] sm:$0xff]
    %v61 = vld [vmem:[#allocation5 + $0x18] sm:$0xff]
    %v62 = vld [vmem:[#allocation5 + $0x20] sm:$0xff]
    %v63 = vld [vmem:[#allocation5 + $0x28] sm:$0xff]
    %v64 = vld [vmem:[#allocation5 + $0x30] sm:$0xff]
    %v65 = vld [vmem:[#allocation5 + $0x38] sm:$0xff]
    %v66 = vld [vmem:[#allocation7] sm:$0x3]
    %v68 = vlaneseq
    %v69 = vshrl.u32 %v68, 7
    %v70 = vsub.s32 0, %v69
    %v71 = vrot.slane %v66, %v70
    %v72 = vlaneseq
    %v73 = vshrl.u32 %v72, 7
    %v74 = vsub.s32 1, %v73
    %v75 = vrot.slane %v66, %v74
    %v86 = vunpack.c.l.b16 %v58
    %v87 = vunpack.c.h.b16 %v58
    %v88 = vunpack.c.l.b16 %v59
    %v89 = vunpack.c.h.b16 %v59
    %v90 = vunpack.c.l.b16 %v60
    %v91 = vunpack.c.h.b16 %v60
    %v92 = vunpack.c.l.b16 %v61
    %v93 = vunpack.c.h.b16 %v61
    %v94 = vunpack.c.l.b16 %v62
    %v95 = vunpack.c.h.b16 %v62
    %v96 = vunpack.c.l.b16 %v63
    %v97 = vunpack.c.h.b16 %v63
    %v98 = vunpack.c.l.b16 %v64
    %v99 = vunpack.c.h.b16 %v64
    %v100 = vunpack.c.l.b16 %v65
    %v101 = vunpack.c.h.b16 %v65
    %v102 = vpack.c.b16 %v88, %v86
    %v103 = vpack.c.b16 %v89, %v87
    %v104 = vpack.c.b16 %v92, %v90
    %v105 = vpack.c.b16 %v93, %v91
    %v106 = vpack.c.b16 %v96, %v94
    %v107 = vpack.c.b16 %v97, %v95
    %v108 = vpack.c.b16 %v100, %v98
    %v109 = vpack.c.b16 %v101, %v99
    %vm118 = vcmask 523264
    %v120 = vsel %vm118, %v57, 0
    %122 = vmatprep.subr.bf16.mxu0 %v103
    %123 = vmatpush1.bf16.msra.mxu0 %v102
    %124 = vmatprep.subr.bf16.mxu0 %v105
    %125 = vmatpush1.bf16.msra.mxu0 %v104
    %126 = vmatprep.subr.bf16.mxu0 %v107
    %127 = vmatpush1.bf16.msra.mxu0 %v106
    %128 = vmatprep.subr.bf16.mxu0 %v109
    %129 = vmatpush1.bf16.msra.mxu0 %v108
    %130 = vmatprep.subr.bf16.mxu0 0
    %131 = vmatpush1.bf16.msra.mxu0 0
    %132 = vmatprep.subr.bf16.mxu0 0
    %133 = vmatpush1.bf16.msra.mxu0 0
    %134 = vmatprep.subr.bf16.mxu0 0
    %135 = vmatpush1.bf16.msra.mxu0 0
    %136 = vmatprep.subr.bf16.mxu0 0
    %137 = vmatpush1.bf16.msra.mxu0 0
    %138 = vmatprep.subr.bf16.mxu0 0
    %139 = vmatpush1.bf16.msra.mxu0 0
    %140 = vmatprep.subr.bf16.mxu0 0
    %141 = vmatpush1.bf16.msra.mxu0 0
    %142 = vmatprep.subr.bf16.mxu0 0
    %143 = vmatpush1.bf16.msra.mxu0 0
    %144 = vmatprep.subr.bf16.mxu0 0
    %145 = vmatpush1.bf16.msra.mxu0 0
    %146 = vmatprep.subr.bf16.mxu0 0
    %147 = vmatpush1.bf16.msra.mxu0 0
    %148 = vmatprep.subr.bf16.mxu0 0
    %149 = vmatpush1.bf16.msra.mxu0 0
    %150 = vmatprep.subr.bf16.mxu0 0
    %151 = vmatpush1.bf16.msra.mxu0 0
    %152 = vmatprep.subr.bf16.mxu0 0
    %153 = vmatpush1.bf16.msra.mxu0 0
    %154 = vmatprep.mubr.bf16.mxu0 0
    %155 = vmatmul.mubr.bf16.gmra.mrb[0].mxu0 %v120
    %v156 = vpop.f32.mrb[0].mxu0
    %v157 = vadd.f32 %v71, %v156
    %v158 = vpop.f32.mrb[0].mxu0
    %v159 = vadd.f32 %v75, %v158
    %v160 = vpop.f32.mrb[0].mxu0
    %v161 = vadd.f32 %v71, %v160
    %v162 = vpop.f32.mrb[0].mxu0
    %v163 = vadd.f32 %v75, %v162
    %164 = vdwg.mxu0
    %v165 = vtanh.pop %v157
    %v166 = vtanh.pop %v159
    %v167 = vtanh.pop %v161
    %v168 = vtanh.pop %v163
    %169 = vst [vmem:[#allocation8] sm:$0xff] %v165
    %170 = vst [vmem:[#allocation8 + $0x8] sm:$0xff] %v166
    %171 = vst [vmem:[#allocation8 + $0x10] sm:$0xff] %v167
    %172 = vst [vmem:[#allocation8 + $0x18] sm:$0xff] %v168
    // Predicated region
    $region26: #{tpu_custom_call.1} parent=1 // pred_check
      _
    $region27: #{tpu_custom_call.1} parent=1 // pred_check_branch
      %174 = sbr.rel (0) target = $region29
    $region28: #{tpu_custom_call.1} parent=1 // pred_region
      %s176 = ssub.s32 512, 512
      %177 = vsyncadd [#allocation4], %s176
      %s178 = sshll.u32 [#allocation8], 4
      %s179 = int_to_ptr.vmem [resolvable:$true] %s178
      %184 = dma.vmem_to_hbm [thread:$0]  %s179, 512, %s3, [#allocation4], 256, 256, 16
    $region29: #{tpu_custom_call.1} parent=1 // pred_fallthru
      _
    // Predicated region
    $region30: #{tpu_custom_call.1} parent=1 // pred_check
      _
    $region31: #{tpu_custom_call.1} parent=1 // pred_check_branch
      %186 = sbr.rel (0) target = $region33
    $region32: #{tpu_custom_call.1} parent=1 // pred_region
      %187 = dma.done [#allocation4], 512
    $region33: #{tpu_custom_call.1} parent=1 // pred_fallthru
      _
    %188 = vsyncpa [#allocation3], 1
    %189 = vsyncpa [#allocation6], 1
    %190 = vsyncpa [#allocation4], 1

</llo_original>
